<compile_context>
chip_gen: v7x
topology: tpu7x:2x2x1
jax: 0.10.0
libtpu: 0.0.40
codegen_flags: <defaults>
</compile_context>

<pallas_src>
import math

import jax
import jax.numpy as jnp
from jax import lax
from jax.experimental import pallas as pl
from jax.experimental.pallas import tpu as pltpu

LEAKY_SLOPE = 0.01  # F.leaky_relu default negative_slope


def _leaky_relu(x):
    return jnp.where(x > 0, x, LEAKY_SLOPE * x)


def _critic_kernel(x_ref, a_ref, w1_ref, b1_ref, w2h_ref, w2a_ref, b2_ref,
                   w3t_ref, b3_ref, out_ref):
    # fc1 + leaky_relu (bias add / activation in f32 on the f32 accumulator).
    h1 = jnp.dot(x_ref[...], w1_ref[...],
                 preferred_element_type=jnp.float32) + b1_ref[...]
    h1 = _leaky_relu(h1).astype(w2h_ref.dtype)

    # fc2 on concat([h1, a]) == h1 @ W2_h + a @ W2_a + b2 (exact split).
    h2 = (jnp.dot(h1, w2h_ref[...], preferred_element_type=jnp.float32)
          + jnp.dot(a_ref[...], w2a_ref[...], preferred_element_type=jnp.float32)
          + b2_ref[...])
    h2 = _leaky_relu(h2).astype(w3t_ref.dtype)

    # fc3, transposed: (1, H2) contracted with (TB, H2) over H2 -> (1, TB).
    # Lane-dense store; wrapper turns (1, B) back into (B, 1).
    q = lax.dot_general(w3t_ref[...], h2,
                        dimension_numbers=(((1,), (1,)), ((), ())),
                        preferred_element_type=jnp.float32)
    out_ref[...] = q + b3_ref[...]


def critic_forward(x, a, params, *, block_b=512, compute_dtype=jnp.bfloat16):
    """x: (B, S) f32, a: (B, A) f32 -> (B, 1) f32."""
    w1, b1, w2h, w2a, b2, w3, b3 = params
    B, S = x.shape
    A = a.shape[1]
    H1 = w1.shape[1]
    H2 = w2h.shape[1]

    # Batch tile: large batches use TB=block_b (multiple of 128, so the
    # lane-dense (1, TB) output block is legal); small batches round up to a
    # multiple of 16 rows (bf16 sublane packing) and run as a single tile.
    if B >= block_b:
        tb = block_b
    else:
        tb = ((B + 15) // 16) * 16
    n_tiles = pl.cdiv(B, tb)
    b_pad = n_tiles * tb

    if b_pad != B:
        x = jnp.pad(x, ((0, b_pad - B), (0, 0)))
        a = jnp.pad(a, ((0, b_pad - B), (0, 0)))

    cd = compute_dtype
    xc = x.astype(cd)
    ac = a.astype(cd)
    w1c = w1.astype(cd)
    w2hc = w2h.astype(cd)
    w2ac = w2a.astype(cd)
    w3t = w3.reshape(1, H2).astype(cd)          # (H2, 1) -> (1, H2)
    b1f = b1.astype(jnp.float32)
    b2f = b2.astype(jnp.float32)
    b3f = b3.reshape(1, 1).astype(jnp.float32)

    ibytes = jnp.dtype(cd).itemsize
    weight_elems = S * H1 + (H1 + A) * H2 + H2
    cost = pl.CostEstimate(
        flops=2 * b_pad * weight_elems,
        transcendentals=0,
        bytes_accessed=(b_pad * (S + A) * ibytes        # activation stream in
                        + weight_elems * ibytes          # resident weights
                        + (H1 + H2 + 1) * 4              # biases (f32)
                        + b_pad * 4),                    # output (f32)
    )

    resident = lambda i: (0, 0)
    out = pl.pallas_call(
        _critic_kernel,
        out_shape=jax.ShapeDtypeStruct((1, b_pad), jnp.float32),
        grid=(n_tiles,),
        in_specs=[
            pl.BlockSpec((tb, S), lambda i: (i, 0)),   # x tile (streamed)
            pl.BlockSpec((tb, A), lambda i: (i, 0)),   # a tile (streamed)
            pl.BlockSpec((S, H1), resident),           # w1   (VMEM-resident)
            pl.BlockSpec((1, H1), resident),           # b1
            pl.BlockSpec((H1, H2), resident),          # w2_h
            pl.BlockSpec((A, H2), resident),           # w2_a
            pl.BlockSpec((1, H2), resident),           # b2
            pl.BlockSpec((1, H2), resident),           # w3^T
            pl.BlockSpec((1, 1), resident),            # b3
        ],
        out_specs=pl.BlockSpec((1, tb), lambda i: (0, i)),
        compiler_params=pltpu.CompilerParams(
            dimension_semantics=("parallel",)),
        cost_estimate=cost,
    )(xc, ac, w1c, b1f, w2hc, w2ac, b2f, w3t, b3f)

    return out[0, :B][:, None]


def init_params(key, state_size, action_size, hidden1, hidden2, init_w):
    """Deterministic parameter init mirroring the PyTorch module shapes.

    he_init: randn(out, in) * sqrt(2 / in)   (fc1, fc2 weights)
    fc3 weight: uniform(-init_w, init_w)
    biases: PyTorch Linear default uniform(-1/sqrt(fan_in), 1/sqrt(fan_in))
    Weights are stored transposed -> (in, out) so the kernel computes x @ W + b.
    """
    ks = jax.random.split(key, 6)

    def he(k, fan_in, fan_out):
        return (jax.random.normal(k, (fan_in, fan_out), jnp.float32)
                * math.sqrt(2.0 / fan_in))

    def bias(k, fan_in, fan_out):
        bound = 1.0 / math.sqrt(fan_in)
        return jax.random.uniform(k, (1, fan_out), jnp.float32, -bound, bound)

    w1 = he(ks[0], state_size, hidden1)                       # (S, H1)
    b1 = bias(ks[1], state_size, hidden1)                     # (1, H1)
    w2_full = he(ks[2], hidden1 + action_size, hidden2)       # (H1+A, H2)
    w2h = w2_full[:hidden1]                                   # (H1, H2)
    w2a = w2_full[hidden1:]                                   # (A,  H2)
    b2 = bias(ks[3], hidden1 + action_size, hidden2)          # (1, H2)
    w3 = jax.random.uniform(ks[4], (hidden2, 1), jnp.float32,
                            -init_w, init_w)                  # (H2, 1)
    b3 = bias(ks[5], hidden2, 1)                              # (1, 1)
    return (w1, b1, w2h, w2a, b2, w3, b3)


def critic_ref(x, a, params, compute_dtype=jnp.bfloat16):
    """Pure-JAX reference mirroring the kernel's bf16/f32 mixed precision."""
    w1, b1, w2h, w2a, b2, w3, b3 = params
    cd = compute_dtype
    h1 = _leaky_relu(
        jnp.dot(x.astype(cd), w1.astype(cd),
                preferred_element_type=jnp.float32) + b1)
    h1 = h1.astype(cd)
    h2 = _leaky_relu(
        jnp.dot(h1, w2h.astype(cd), preferred_element_type=jnp.float32)
        + jnp.dot(a.astype(cd), w2a.astype(cd),
                  preferred_element_type=jnp.float32)
        + b2)
    h2 = h2.astype(cd)
    return jnp.dot(h2, w3.astype(cd), preferred_element_type=jnp.float32) + b3


if __name__ == "__main__":
    # Small, module-consistent shapes.
    B, S, A, H1, H2 = 8, 16, 8, 32, 32
    init_w = 3e-3

    key = jax.random.PRNGKey(0)
    kx, ka, kp = jax.random.split(key, 3)
    x = jax.random.normal(kx, (B, S), jnp.float32)
    a = jax.random.normal(ka, (B, A), jnp.float32)
    params = init_params(kp, S, A, H1, H2, init_w)

    out = critic_forward(x, a, params)
    out = jax.block_until_ready(out)

    ref = critic_ref(x, a, params)
    assert out.shape == (B, 1), out.shape
    max_err = jnp.max(jnp.abs(out - ref))
    assert jnp.allclose(out, ref, atol=2e-3, rtol=2e-3), (
        f"mismatch: max abs err {max_err}")

    print("KERNEL_OK")
</pallas_src>

<mosaic_0001>
module attributes {stable_mosaic.version = 11 : i64} {
  func.func @_critic_kernel(%arg0: i32, %arg1: memref<16x16xbf16, #tpu.memory_space<vmem>>, %arg2: memref<16x8xbf16, #tpu.memory_space<vmem>>, %arg3: memref<16x32xbf16, #tpu.memory_space<vmem>>, %arg4: memref<1x32xf32, #tpu.memory_space<vmem>>, %arg5: memref<32x32xbf16, #tpu.memory_space<vmem>>, %arg6: memref<8x32xbf16, #tpu.memory_space<vmem>>, %arg7: memref<1x32xf32, #tpu.memory_space<vmem>>, %arg8: memref<1x32xbf16, #tpu.memory_space<vmem>>, %arg9: memref<1x1xf32, #tpu.memory_space<vmem>>, %arg10: memref<1x16xf32, #tpu.memory_space<vmem>>) attributes {dimension_semantics = [#tpu.dimension_semantics<parallel>], iteration_bounds = array<i64: 1>, scalar_prefetch = 0 : i64, scratch_operands = 0 : i64, tpu.core_type = #tpu.core_type<tc>, window_params = [{transform_indices = @transform_0, window_bounds = array<i64: 16, 16>}, {transform_indices = @transform_1, window_bounds = array<i64: 16, 8>}, {pipeline_mode = #tpu.pipeline_mode<synchronous>, transform_indices = @transform_2, window_bounds = array<i64: 16, 32>}, {pipeline_mode = #tpu.pipeline_mode<synchronous>, transform_indices = @transform_3, window_bounds = array<i64: 1, 32>}, {pipeline_mode = #tpu.pipeline_mode<synchronous>, transform_indices = @transform_4, window_bounds = array<i64: 32, 32>}, {pipeline_mode = #tpu.pipeline_mode<synchronous>, transform_indices = @transform_5, window_bounds = array<i64: 8, 32>}, {pipeline_mode = #tpu.pipeline_mode<synchronous>, transform_indices = @transform_6, window_bounds = array<i64: 1, 32>}, {pipeline_mode = #tpu.pipeline_mode<synchronous>, transform_indices = @transform_7, window_bounds = array<i64: 1, 32>}, {pipeline_mode = #tpu.pipeline_mode<synchronous>, transform_indices = @transform_8, window_bounds = array<i64: 1, 1>}, {transform_indices = @transform_9, window_bounds = array<i64: 1, 16>}]} {
    %c0 = arith.constant 0 : index
    %c0_0 = arith.constant 0 : index
    %0 = vector.load %arg1[%c0, %c0_0] : memref<16x16xbf16, #tpu.memory_space<vmem>>, vector<16x16xbf16>
    %c0_1 = arith.constant 0 : index
    %c0_2 = arith.constant 0 : index
    %1 = vector.load %arg3[%c0_1, %c0_2] : memref<16x32xbf16, #tpu.memory_space<vmem>>, vector<16x32xbf16>
    %cst = arith.constant dense<0.000000e+00> : vector<16x32xf32>
    %2 = tpu.matmul %0, %1, %cst {dimension_numbers = #tpu.dot_dimension_numbers<[1], [0], [0], [1], [0, 0, 1, 1], [], []>} : vector<16x16xbf16>, vector<16x32xbf16>, vector<16x32xf32> -> vector<16x32xf32>
    %c0_3 = arith.constant 0 : index
    %c0_4 = arith.constant 0 : index
    %3 = vector.load %arg4[%c0_3, %c0_4] : memref<1x32xf32, #tpu.memory_space<vmem>>, vector<1x32xf32>
    %4 = vector.broadcast %3 : vector<1x32xf32> to vector<16x32xf32>
    %5 = arith.addf %2, %4 : vector<16x32xf32>
    %cst_5 = arith.constant 0.000000e+00 : f32
    %6 = vector.broadcast %cst_5 : f32 to vector<16x32xf32>
    %7 = arith.cmpf ogt, %5, %6 : vector<16x32xf32>
    %cst_6 = arith.constant 0.00999999977 : f32
    %8 = vector.broadcast %cst_6 : f32 to vector<16x32xf32>
    %9 = arith.mulf %8, %5 : vector<16x32xf32>
    %10 = arith.select %7, %5, %9 : vector<16x32xi1>, vector<16x32xf32>
    %11 = arith.truncf %10 : vector<16x32xf32> to vector<16x32xbf16>
    %c0_7 = arith.constant 0 : index
    %c0_8 = arith.constant 0 : index
    %12 = vector.load %arg5[%c0_7, %c0_8] : memref<32x32xbf16, #tpu.memory_space<vmem>>, vector<32x32xbf16>
    %cst_9 = arith.constant dense<0.000000e+00> : vector<16x32xf32>
    %13 = tpu.matmul %11, %12, %cst_9 {dimension_numbers = #tpu.dot_dimension_numbers<[1], [0], [0], [1], [0, 0, 1, 1], [], []>} : vector<16x32xbf16>, vector<32x32xbf16>, vector<16x32xf32> -> vector<16x32xf32>
    %c0_10 = arith.constant 0 : index
    %c0_11 = arith.constant 0 : index
    %14 = vector.load %arg2[%c0_10, %c0_11] : memref<16x8xbf16, #tpu.memory_space<vmem>>, vector<16x8xbf16>
    %c0_12 = arith.constant 0 : index
    %c0_13 = arith.constant 0 : index
    %15 = vector.load %arg6[%c0_12, %c0_13] : memref<8x32xbf16, #tpu.memory_space<vmem>>, vector<8x32xbf16>
    %cst_14 = arith.constant dense<0.000000e+00> : vector<16x32xf32>
    %16 = tpu.matmul %14, %15, %cst_14 {dimension_numbers = #tpu.dot_dimension_numbers<[1], [0], [0], [1], [0, 0, 1, 1], [], []>} : vector<16x8xbf16>, vector<8x32xbf16>, vector<16x32xf32> -> vector<16x32xf32>
    %17 = arith.addf %13, %16 : vector<16x32xf32>
    %c0_15 = arith.constant 0 : index
    %c0_16 = arith.constant 0 : index
    %18 = vector.load %arg7[%c0_15, %c0_16] : memref<1x32xf32, #tpu.memory_space<vmem>>, vector<1x32xf32>
    %19 = vector.broadcast %18 : vector<1x32xf32> to vector<16x32xf32>
    %20 = arith.addf %17, %19 : vector<16x32xf32>
    %cst_17 = arith.constant 0.000000e+00 : f32
    %21 = vector.broadcast %cst_17 : f32 to vector<16x32xf32>
    %22 = arith.cmpf ogt, %20, %21 : vector<16x32xf32>
    %cst_18 = arith.constant 0.00999999977 : f32
    %23 = vector.broadcast %cst_18 : f32 to vector<16x32xf32>
    %24 = arith.mulf %23, %20 : vector<16x32xf32>
    %25 = arith.select %22, %20, %24 : vector<16x32xi1>, vector<16x32xf32>
    %26 = arith.truncf %25 : vector<16x32xf32> to vector<16x32xbf16>
    %c0_19 = arith.constant 0 : index
    %c0_20 = arith.constant 0 : index
    %27 = vector.load %arg8[%c0_19, %c0_20] : memref<1x32xbf16, #tpu.memory_space<vmem>>, vector<1x32xbf16>
    %cst_21 = arith.constant dense<0.000000e+00> : vector<1x16xf32>
    %28 = tpu.matmul %27, %26, %cst_21 {dimension_numbers = #tpu.dot_dimension_numbers<[1], [1], [0], [0], [0, 0, 1, 0], [], []>} : vector<1x32xbf16>, vector<16x32xbf16>, vector<1x16xf32> -> vector<1x16xf32>
    %c0_22 = arith.constant 0 : index
    %c0_23 = arith.constant 0 : index
    %29 = vector.load %arg9[%c0_22, %c0_23] : memref<1x1xf32, #tpu.memory_space<vmem>>, vector<1x1xf32>
    %30 = vector.broadcast %29 : vector<1x1xf32> to vector<1x16xf32>
    %31 = arith.addf %28, %30 : vector<1x16xf32>
    %c0_24 = arith.constant 0 : index
    %c0_25 = arith.constant 0 : index
    %32 = vector.load %arg10[%c0_24, %c0_25] : memref<1x16xf32, #tpu.memory_space<vmem>>, vector<1x16xf32>
    tpu.vector_store %arg10[%c0_24, %c0_25], %31 {strides = array<i32>} : memref<1x16xf32, #tpu.memory_space<vmem>>, vector<1x16xf32>,
    return
  }
  func.func @transform_0(%arg0: i32) -> (i32, i32) {
    %c0_i32 = arith.constant 0 : i32
    %c0_i32_0 = arith.constant 0 : i32
    return %arg0, %c0_i32 : i32, i32
  }
  func.func @transform_1(%arg0: i32) -> (i32, i32) {
    %c0_i32 = arith.constant 0 : i32
    %c0_i32_0 = arith.constant 0 : i32
    return %arg0, %c0_i32 : i32, i32
  }
  func.func @transform_2(%arg0: i32) -> (i32, i32) {
    %c0_i32 = arith.constant 0 : i32
    %c0_i32_0 = arith.constant 0 : i32
    %c0_i32_1 = arith.constant 0 : i32
    return %c0_i32, %c0_i32_0 : i32, i32
  }
  func.func @transform_3(%arg0: i32) -> (i32, i32) {
    %c0_i32 = arith.constant 0 : i32
    %c0_i32_0 = arith.constant 0 : i32
    %c0_i32_1 = arith.constant 0 : i32
    return %c0_i32, %c0_i32_0 : i32, i32
  }
  func.func @transform_4(%arg0: i32) -> (i32, i32) {
    %c0_i32 = arith.constant 0 : i32
    %c0_i32_0 = arith.constant 0 : i32
    %c0_i32_1 = arith.constant 0 : i32
    return %c0_i32, %c0_i32_0 : i32, i32
  }
  func.func @transform_5(%arg0: i32) -> (i32, i32) {
    %c0_i32 = arith.constant 0 : i32
    %c0_i32_0 = arith.constant 0 : i32
    %c0_i32_1 = arith.constant 0 : i32
    return %c0_i32, %c0_i32_0 : i32, i32
  }
  func.func @transform_6(%arg0: i32) -> (i32, i32) {
    %c0_i32 = arith.constant 0 : i32
    %c0_i32_0 = arith.constant 0 : i32
    %c0_i32_1 = arith.constant 0 : i32
    return %c0_i32, %c0_i32_0 : i32, i32
  }
  func.func @transform_7(%arg0: i32) -> (i32, i32) {
    %c0_i32 = arith.constant 0 : i32
    %c0_i32_0 = arith.constant 0 : i32
    %c0_i32_1 = arith.constant 0 : i32
    return %c0_i32, %c0_i32_0 : i32, i32
  }
  func.func @transform_8(%arg0: i32) -> (i32, i32) {
    %c0_i32 = arith.constant 0 : i32
    %c0_i32_0 = arith.constant 0 : i32
    %c0_i32_1 = arith.constant 0 : i32
    return %c0_i32, %c0_i32_0 : i32, i32
  }
  func.func @transform_9(%arg0: i32) -> (i32, i32) {
    %c0_i32 = arith.constant 0 : i32
    %c0_i32_0 = arith.constant 0 : i32
    return %c0_i32, %arg0 : i32, i32
  }
}

</mosaic_0001>

<llo_original>
// kernel: tpu_custom_call.1
$region0: #{tpu_custom_call.1}
  #allocation0 [shape = 'u32[]', space=smem, size = 0x4, offset = 0x4, fixed_abs, tag = 'smem constant byte address 0x4 - core index']
  #allocation1 [shape = 'u32[144,128]{1,0:T(1,128)}', space=vmem, size = 0x12000, scoped, tag = 'internal scratch']
  #allocation2 [shape = 'f32[1,1]{1,0:T(1,128)S(1)}', space=vmem, size = 0x200, scoped, tag = 'scoped memory for tpu_custom_call.1']
  %s0 = inlined_call_operand.vmem [shape: bf16[16,16], index: 0, kind: input, shape index: {}]
  %s1 = inlined_call_operand.vmem [shape: bf16[16,8], index: 1, kind: input, shape index: {}]
  %s2 = inlined_call_operand.hbm [shape: bf16[16,32], index: 2, kind: input, shape index: {}]
  %s3 = inlined_call_operand.vmem [shape: f32[1,32], index: 3, kind: input, shape index: {}]
  %s4 = inlined_call_operand.vmem [shape: bf16[32,32], index: 4, kind: input, shape index: {}]
  %s5 = inlined_call_operand.vmem [shape: bf16[8,32], index: 5, kind: input, shape index: {}]
  %s6 = inlined_call_operand.vmem [shape: f32[1,32], index: 6, kind: input, shape index: {}]
  %s7 = inlined_call_operand.vmem [shape: bf16[1,32], index: 7, kind: input, shape index: {}]
  %s8 = inlined_call_operand.<no memory space> [shape: f32[1,1], index: 8, kind: input, shape index: {}]
  %s9 = inlined_call_operand.hbm [shape: f32[1,16], index: 9, kind: output, shape index: {}]
  %s10 = sld [smem:[#allocation0]]
  $region50: #{tpu_custom_call.1} parent=0
    _
  %s12 = ssub.s32 1, %s10
  %s13 = scalar_select 0, %s12, %s10
  %v14 = vstv %s8
  %15 = vst [vmem:[#allocation2] sm:$0x1] %v14
  $region1: #{tpu_custom_call.1} parent=0
    #allocation3 [shape = 'u8[4096]{0}', space=vmem, size = 0x1000, scoped, tag = 'input window, operand 2, single buffered']
    #allocation4 [shape = 's32[1]{0}', space=sflag, size = 0x4, scoped, tag = 'scoped memory for tpu_custom_call.1']
    #allocation5 [shape = 's32[1]{0}', space=sflag, size = 0x4, scoped, tag = 'scoped memory for tpu_custom_call.1']
    #allocation6 [shape = 'u8[512]{0}', space=vmem, size = 0x400, scoped, tag = 'output window, operand 0, single buffered']
    %16 = vsyncpa [#allocation4], 0
    %17 = vsyncpa [#allocation5], 0
    // Predicated region
    $region2: #{tpu_custom_call.1} parent=1 // pred_check
      _
    $region3: #{tpu_custom_call.1} parent=1 // pred_check_branch
      %19 = sbr.rel (0) target = $region5
    $region4: #{tpu_custom_call.1} parent=1 // pred_region
      _
    $region5: #{tpu_custom_call.1} parent=1 // pred_fallthru
      _
    // Predicated region
    $region6: #{tpu_custom_call.1} parent=1 // pred_check
      _
    $region7: #{tpu_custom_call.1} parent=1 // pred_check_branch
      %21 = sbr.rel (0) target = $region9
    $region8: #{tpu_custom_call.1} parent=1 // pred_region
      _
    $region9: #{tpu_custom_call.1} parent=1 // pred_fallthru
      _
    // Predicated region
    $region10: #{tpu_custom_call.1} parent=1 // pred_check
      _
    $region11: #{tpu_custom_call.1} parent=1 // pred_check_branch
      %23 = sbr.rel (0) target = $region13
    $region12: #{tpu_custom_call.1} parent=1 // pred_region
      %s25 = ssub.s32 128, 128
      %26 = vsyncadd [#allocation4], %s25
      %s27 = sshll.u32 [#allocation3], 4
      %s28 = int_to_ptr.vmem [resolvable:$true] %s27
      %33 = dma.hbm_to_vmem [thread:$0]  %s2, 128, %s28, [#allocation4], 64, 64, 4
    $region13: #{tpu_custom_call.1} parent=1 // pred_fallthru
      _
    // Predicated region
    $region14: #{tpu_custom_call.1} parent=1 // pred_check
      _
    $region15: #{tpu_custom_call.1} parent=1 // pred_check_branch
      %35 = sbr.rel (0) target = $region17
    $region16: #{tpu_custom_call.1} parent=1 // pred_region
      _
    $region17: #{tpu_custom_call.1} parent=1 // pred_fallthru
      _
    // Predicated region
    $region18: #{tpu_custom_call.1} parent=1 // pred_check
      _
    $region19: #{tpu_custom_call.1} parent=1 // pred_check_branch
      %37 = sbr.rel (0) target = $region21
    $region20: #{tpu_custom_call.1} parent=1 // pred_region
      _
    $region21: #{tpu_custom_call.1} parent=1 // pred_fallthru
      _
    // Predicated region
    $region22: #{tpu_custom_call.1} parent=1 // pred_check
      _
    $region23: #{tpu_custom_call.1} parent=1 // pred_check_branch
      %39 = sbr.rel (0) target = $region25
    $region24: #{tpu_custom_call.1} parent=1 // pred_region
      _
    $region25: #{tpu_custom_call.1} parent=1 // pred_fallthru
      _
    // Predicated region
    $region26: #{tpu_custom_call.1} parent=1 // pred_check
      _
    $region27: #{tpu_custom_call.1} parent=1 // pred_check_branch
      %41 = sbr.rel (0) target = $region29
    $region28: #{tpu_custom_call.1} parent=1 // pred_region
      _
    $region29: #{tpu_custom_call.1} parent=1 // pred_fallthru
      _
    // Predicated region
    $region30: #{tpu_custom_call.1} parent=1 // pred_check
      _
    $region31: #{tpu_custom_call.1} parent=1 // pred_check_branch
      %43 = sbr.rel (0) target = $region33
    $region32: #{tpu_custom_call.1} parent=1 // pred_region
      _
    $region33: #{tpu_custom_call.1} parent=1 // pred_fallthru
      _
    // Predicated region
    $region34: #{tpu_custom_call.1} parent=1 // pred_check
      _
    $region35: #{tpu_custom_call.1} parent=1 // pred_check_branch
      %45 = sbr.rel (0) target = $region37
    $region36: #{tpu_custom_call.1} parent=1 // pred_region
      _
    $region37: #{tpu_custom_call.1} parent=1 // pred_fallthru
      _
    // Predicated region
    $region38: #{tpu_custom_call.1} parent=1 // pred_check
      _
    $region39: #{tpu_custom_call.1} parent=1 // pred_check_branch
      %47 = sbr.rel (0) target = $region41
    $region40: #{tpu_custom_call.1} parent=1 // pred_region
      %48 = dma.done [#allocation4], 128
    $region41: #{tpu_custom_call.1} parent=1 // pred_fallthru
      _
    %v50 = vld [vmem:[%s0] sm:$0xf]
    %v51 = vld [vmem:[%s0 + $0x4] sm:$0xf]
    %v52 = vld [vmem:[#allocation3] sm:$0xf]
    %v53 = vld [vmem:[#allocation3 + $0x4] sm:$0xf]
    %v54 = vld [vmem:[%s3] sm:$0x1]
    %v56 = vlaneseq
    %v57 = vshrl.u32 %v56, 7
    %v58 = vsub.s32 0, %v57
    %v59 = vrot.slane %v54, %v58
    %v63 = vunpack.c.l.b16 %v50
    %v64 = vunpack.c.l.b16 %v51
    %v65 = vpack.c.b16 %v64, %v63
    %v68 = vunpack.c.l.b16 %v52
    %v69 = vunpack.c.l.b16 %v53
    %v70 = vpack.c.b16 %v69, %v68
    %vm72 = vcmask 130048
    %v74 = vsel %vm72, %v65, 0
    %76 = vmatprep.subr.bf16.mxu0 0
    %77 = vmatpush1.bf16.msra.mxu0 %v70
    %78 = vmatprep.subr.bf16.mxu0 0
    %79 = vmatpush1.bf16.msra.mxu0 0
    %80 = vmatprep.subr.bf16.mxu0 0
    %81 = vmatpush1.bf16.msra.mxu0 0
    %82 = vmatprep.subr.bf16.mxu0 0
    %83 = vmatpush1.bf16.msra.mxu0 0
    %84 = vmatprep.subr.bf16.mxu0 0
    %85 = vmatpush1.bf16.msra.mxu0 0
    %86 = vmatprep.subr.bf16.mxu0 0
    %87 = vmatpush1.bf16.msra.mxu0 0
    %88 = vmatprep.subr.bf16.mxu0 0
    %89 = vmatpush1.bf16.msra.mxu0 0
    %90 = vmatprep.subr.bf16.mxu0 0
    %91 = vmatpush1.bf16.msra.mxu0 0
    %92 = vmatprep.subr.bf16.mxu0 0
    %93 = vmatpush1.bf16.msra.mxu0 0
    %94 = vmatprep.subr.bf16.mxu0 0
    %95 = vmatpush1.bf16.msra.mxu0 0
    %96 = vmatprep.subr.bf16.mxu0 0
    %97 = vmatpush1.bf16.msra.mxu0 0
    %98 = vmatprep.subr.bf16.mxu0 0
    %99 = vmatpush1.bf16.msra.mxu0 0
    %100 = vmatprep.subr.bf16.mxu0 0
    %101 = vmatpush1.bf16.msra.mxu0 0
    %102 = vmatprep.subr.bf16.mxu0 0
    %103 = vmatpush1.bf16.msra.mxu0 0
    %104 = vmatprep.subr.bf16.mxu0 0
    %105 = vmatpush1.bf16.msra.mxu0 0
    %106 = vmatprep.subr.bf16.mxu0 0
    %107 = vmatpush1.bf16.msra.mxu0 0
    %108 = vmatprep.mubr.bf16.mxu0 0
    %109 = vmatmul.mubr.bf16.gmra.mrb[0].mxu0 %v74
    %v110 = vpop.f32.mrb[0].mxu0
    %v111 = vadd.f32 %v59, %v110
    %v112 = vpop.f32.mrb[0].mxu0
    %v113 = vpop.f32.mrb[0].mxu0
    %v114 = vadd.f32 %v59, %v113
    %v115 = vpop.f32.mrb[0].mxu0
    %116 = vdwg.mxu0
    %vm117 = vcmp.gt.f32.partialorder %v111, 0.0
    %vm118 = vcmp.gt.f32.partialorder %v114, 0.0
    %v119 = vmul.f32 %v111, 0.01
    %v120 = vmul.f32 %v114, 0.01
    %v121 = vsel %vm117, %v111, %v119
    %v122 = vsel %vm118, %v114, %v120
    %v123 = vpack.c.bf16 %v122, %v121
    %v124 = vld [vmem:[%s4] sm:$0xf]
    %v125 = vld [vmem:[%s4 + $0x4] sm:$0xf]
    %v126 = vld [vmem:[%s4 + $0x8] sm:$0xf]
    %v127 = vld [vmem:[%s4 + $0xc] sm:$0xf]
    %v128 = vld [vmem:[%s1] sm:$0xf]
    %v129 = vld [vmem:[%s1 + $0x4] sm:$0xf]
    %v130 = vld [vmem:[%s5] sm:$0xf]
    %v133 = vunpack.c.l.b16 %v128
    %v134 = vunpack.c.l.b16 %v129
    %v135 = vpack.c.b16 %v134, %v133
    %vm136 = vcmask 64512
    %v138 = vsel %vm136, %v135, 0
    %vm140 = vcmask 1043456
    %v142 = vsel %vm140, %v130, 0
    %144 = vmatprep.subr.bf16.mxu0 0
    %145 = vmatpush1.bf16.msra.mxu0 %v142
    %146 = vmatprep.subr.bf16.mxu0 0
    %147 = vmatpush1.bf16.msra.mxu0 0
    %148 = vmatprep.subr.bf16.mxu0 0
    %149 = vmatpush1.bf16.msra.mxu0 0
    %150 = vmatprep.subr.bf16.mxu0 0
    %151 = vmatpush1.bf16.msra.mxu0 0
    %152 = vmatprep.subr.bf16.mxu0 0
    %153 = vmatpush1.bf16.msra.mxu0 0
    %154 = vmatprep.subr.bf16.mxu0 0
    %155 = vmatpush1.bf16.msra.mxu0 0
    %156 = vmatprep.subr.bf16.mxu0 0
    %157 = vmatpush1.bf16.msra.mxu0 0
    %158 = vmatprep.subr.bf16.mxu0 0
    %159 = vmatpush1.bf16.msra.mxu0 0
    %160 = vmatprep.subr.bf16.mxu0 0
    %161 = vmatpush1.bf16.msra.mxu0 0
    %162 = vmatprep.subr.bf16.mxu0 0
    %163 = vmatpush1.bf16.msra.mxu0 0
    %164 = vmatprep.subr.bf16.mxu0 0
    %165 = vmatpush1.bf16.msra.mxu0 0
    %166 = vmatprep.subr.bf16.mxu0 0
    %167 = vmatpush1.bf16.msra.mxu0 0
    %168 = vmatprep.subr.bf16.mxu0 0
    %169 = vmatpush1.bf16.msra.mxu0 0
    %170 = vmatprep.subr.bf16.mxu0 0
    %171 = vmatpush1.bf16.msra.mxu0 0
    %172 = vmatprep.subr.bf16.mxu0 0
    %173 = vmatpush1.bf16.msra.mxu0 0
    %174 = vmatprep.subr.bf16.mxu0 0
    %175 = vmatpush1.bf16.msra.mxu0 0
    %176 = vmatprep.mubr.bf16.mxu0 0
    %177 = vmatmul.mubr.bf16.gmra.mrb[0].mxu0 %v138
    %v178 = vpop.f32.mrb[0].mxu0
    %v179 = vadd.f32 0.0, %v178
    %v180 = vpop.f32.mrb[0].mxu0
    %v181 = vpop.f32.mrb[0].mxu0
    %v182 = vadd.f32 0.0, %v181
    %v183 = vpop.f32.mrb[0].mxu0
    %184 = vdwg.mxu0
    %v189 = vunpack.c.l.b16 %v124
    %v190 = vunpack.c.l.b16 %v125
    %v191 = vunpack.c.l.b16 %v126
    %v192 = vunpack.c.l.b16 %v127
    %v193 = vpack.c.b16 %v190, %v189
    %v194 = vpack.c.b16 %v192, %v191
    %vm197 = vcmask 261120
    %v199 = vsel %vm197, %v123, 0
    %201 = vmatprep.subr.bf16.mxu0 0
    %202 = vmatpush1.bf16.msra.mxu0 %v193
    %203 = vmatprep.subr.bf16.mxu0 0
    %204 = vmatpush1.bf16.msra.mxu0 %v194
    %205 = vmatprep.subr.bf16.mxu0 0
    %206 = vmatpush1.bf16.msra.mxu0 0
    %207 = vmatprep.subr.bf16.mxu0 0
    %208 = vmatpush1.bf16.msra.mxu0 0
    %209 = vmatprep.subr.bf16.mxu0 0
    %210 = vmatpush1.bf16.msra.mxu0 0
    %211 = vmatprep.subr.bf16.mxu0 0
    %212 = vmatpush1.bf16.msra.mxu0 0
    %213 = vmatprep.subr.bf16.mxu0 0
    %214 = vmatpush1.bf16.msra.mxu0 0
    %215 = vmatprep.subr.bf16.mxu0 0
    %216 = vmatpush1.bf16.msra.mxu0 0
    %217 = vmatprep.subr.bf16.mxu0 0
    %218 = vmatpush1.bf16.msra.mxu0 0
    %219 = vmatprep.subr.bf16.mxu0 0
    %220 = vmatpush1.bf16.msra.mxu0 0
    %221 = vmatprep.subr.bf16.mxu0 0
    %222 = vmatpush1.bf16.msra.mxu0 0
    %223 = vmatprep.subr.bf16.mxu0 0
    %224 = vmatpush1.bf16.msra.mxu0 0
    %225 = vmatprep.subr.bf16.mxu0 0
    %226 = vmatpush1.bf16.msra.mxu0 0
    %227 = vmatprep.subr.bf16.mxu0 0
    %228 = vmatpush1.bf16.msra.mxu0 0
    %229 = vmatprep.subr.bf16.mxu0 0
    %230 = vmatpush1.bf16.msra.mxu0 0
    %231 = vmatprep.subr.bf16.mxu0 0
    %232 = vmatpush1.bf16.msra.mxu0 0
    %233 = vmatprep.mubr.bf16.mxu0 0
    %234 = vmatmul.mubr.bf16.gmra.mrb[0].mxu0 %v199
    %v235 = vpop.f32.mrb[0].mxu0
    %v236 = vadd.f32 %v179, %v235
    %v237 = vpop.f32.mrb[0].mxu0
    %v238 = vpop.f32.mrb[0].mxu0
    %v239 = vadd.f32 %v182, %v238
    %v240 = vpop.f32.mrb[0].mxu0
    %241 = vdwg.mxu0
    %v242 = vld [vmem:[%s6] sm:$0x1]
    %v244 = vlaneseq
    %v245 = vshrl.u32 %v244, 7
    %v246 = vsub.s32 0, %v245
    %v247 = vrot.slane %v242, %v246
    %v249 = vadd.f32 %v236, %v247
    %v250 = vadd.f32 %v239, %v247
    %vm251 = vcmp.gt.f32.partialorder %v249, 0.0
    %vm252 = vcmp.gt.f32.partialorder %v250, 0.0
    %v253 = vmul.f32 %v249, 0.01
    %v254 = vmul.f32 %v250, 0.01
    %v255 = vsel %vm251, %v249, %v253
    %v256 = vsel %vm252, %v250, %v254
    %v257 = vpack.c.bf16 %v256, %v255
    %v258 = vld [vmem:[%s7] sm:$0x1]
    %v259 = vld [vmem:[#allocation2] sm:$0x1]
    %261 = vset.pattern.permute.xlu0 0
    %262 = vperm.xlu0 %261, %v259
    %v263 = vpop.permute.xlu0 %262
    %v265 = vlaneseq
    %v266 = vshrl.u32 %v265, 7
    %v267 = vsub.s32 0, %v266
    %v268 = vrot.slane %v263, %v267
    %v270 = vsel %vm197, %v258, 0
    %v273 = vsel %vm197, %v257, 0
    %275 = vmatprep.subr.bf16.mxu0 0
    %276 = vmatpush1.bf16.xpose.msra.mxu0 %v273
    %277 = vmatprep.subr.bf16.mxu0 0
    %278 = vmatpush1.bf16.xpose.msra.mxu0 0
    %279 = vmatprep.subr.bf16.mxu0 0
    %280 = vmatpush1.bf16.xpose.msra.mxu0 0
    %281 = vmatprep.subr.bf16.mxu0 0
    %282 = vmatpush1.bf16.xpose.msra.mxu0 0
    %283 = vmatprep.subr.bf16.mxu0 0
    %284 = vmatpush1.bf16.xpose.msra.mxu0 0
    %285 = vmatprep.subr.bf16.mxu0 0
    %286 = vmatpush1.bf16.xpose.msra.mxu0 0
    %287 = vmatprep.subr.bf16.mxu0 0
    %288 = vmatpush1.bf16.xpose.msra.mxu0 0
    %289 = vmatprep.subr.bf16.mxu0 0
    %290 = vmatpush1.bf16.xpose.msra.mxu0 0
    %291 = vmatprep.subr.bf16.mxu0 0
    %292 = vmatpush1.bf16.xpose.msra.mxu0 0
    %293 = vmatprep.subr.bf16.mxu0 0
    %294 = vmatpush1.bf16.xpose.msra.mxu0 0
    %295 = vmatprep.subr.bf16.mxu0 0
    %296 = vmatpush1.bf16.xpose.msra.mxu0 0
    %297 = vmatprep.subr.bf16.mxu0 0
    %298 = vmatpush1.bf16.xpose.msra.mxu0 0
    %299 = vmatprep.subr.bf16.mxu0 0
    %300 = vmatpush1.bf16.xpose.msra.mxu0 0
    %301 = vmatprep.subr.bf16.mxu0 0
    %302 = vmatpush1.bf16.xpose.msra.mxu0 0
    %303 = vmatprep.subr.bf16.mxu0 0
    %304 = vmatpush1.bf16.xpose.msra.mxu0 0
    %305 = vmatprep.subr.bf16.mxu0 0
    %306 = vmatpush1.bf16.xpose.msra.mxu0 0
    %307 = vmatprep.mubr.bf16.mxu0 0
    %308 = vmatmul.mubr.bf16.gmra.mrb[0].mxu0 %v270
    %v309 = vpop.f32.mrb[0].mxu0
    %v310 = vadd.f32 %v268, %v309
    %v311 = vpop.f32.mrb[0].mxu0
    %v312 = vpop.f32.mrb[0].mxu0
    %v313 = vpop.f32.mrb[0].mxu0
    %314 = vdwg.mxu0
    %vm315 = vcmask 122880
    %316 = vst.msk [vmem:[#allocation6] sm:$0x1] %vm315, %v310
    // Predicated region
    $region42: #{tpu_custom_call.1} parent=1 // pred_check
      _
    $region43: #{tpu_custom_call.1} parent=1 // pred_check_branch
      %318 = sbr.rel (0) target = $region45
    $region44: #{tpu_custom_call.1} parent=1 // pred_region
      %s320 = ssub.s32 16, 16
      %321 = vsyncadd [#allocation5], %s320
      %s323 = sshll.u32 [#allocation6], 4
      %s324 = int_to_ptr.vmem [resolvable:$true] %s323
      %326 = dma.vmem_to_hbm [thread:$0]  %s324, 16, %s9, [#allocation5]
    $region45: #{tpu_custom_call.1} parent=1 // pred_fallthru
      _
    // Predicated region
    $region46: #{tpu_custom_call.1} parent=1 // pred_check
      _
    $region47: #{tpu_custom_call.1} parent=1 // pred_check_branch
      %328 = sbr.rel (0) target = $region49
    $region48: #{tpu_custom_call.1} parent=1 // pred_region
      %329 = dma.done [#allocation5], 16
    $region49: #{tpu_custom_call.1} parent=1 // pred_fallthru
      _
    %330 = vsyncpa [#allocation4], 1
    %331 = vsyncpa [#allocation5], 1

</llo_original>
